<compile_context>
chip_gen: v7x
topology: tpu7x:2x2x1
jax: 0.10.0
libtpu: 0.0.40
codegen_flags: <defaults>
</compile_context>

<pallas_src>
import math

import jax
import jax.numpy as jnp
from jax.experimental import pallas as pl
from jax.experimental.pallas import tpu as pltpu


def _round_up(x, m):
    return ((x + m - 1) // m) * m


# ---------------------------------------------------------------------------
# Fused kernels
# ---------------------------------------------------------------------------
def _encoder_fused_kernel(ids_ref, table_ref, h_ref, wx_ref, wh_ref, b_ref,
                          out_ref):
    """General path: explicit (possibly nonzero) initial hidden state."""
    B = ids_ref.shape[0]
    V = table_ref.shape[0]
    H = out_ref.shape[1]
    f32 = jnp.float32

    # Embedding gather as one-hot @ table (table fully resident in VMEM).
    ids = ids_ref[...]                                               # [B, 1] i32
    cols = jax.lax.broadcasted_iota(jnp.int32, (B, V), 1)
    onehot = (ids == cols).astype(f32)                               # [B, V]
    x = jnp.dot(onehot, table_ref[...], preferred_element_type=f32)  # [B, E]

    h = h_ref[...].astype(f32)                                       # [B, H]
    g = (jnp.dot(x, wx_ref[...], preferred_element_type=f32)
         + jnp.dot(h, wh_ref[...], preferred_element_type=f32)
         + b_ref[...])                                               # [B, >=4H]

    r = jax.nn.sigmoid(g[:, 0:H])
    z = jax.nn.sigmoid(g[:, H:2 * H])
    n = jnp.tanh(g[:, 2 * H:3 * H] + r * g[:, 3 * H:4 * H])
    out_ref[...] = ((1.0 - z) * n + z * h).astype(out_ref.dtype)


def _encoder_fused_h0_kernel(ids_ref, table_ref, wx_ref, b_ref, out_ref):
    """Specialized path for hidden=None (h0 == 0): no recurrent matmul,
    no z*h blend; h_n collapses to b_hn already present in the packed bias."""
    B = ids_ref.shape[0]
    V = table_ref.shape[0]
    H = out_ref.shape[1]
    f32 = jnp.float32

    ids = ids_ref[...]
    cols = jax.lax.broadcasted_iota(jnp.int32, (B, V), 1)
    onehot = (ids == cols).astype(f32)
    x = jnp.dot(onehot, table_ref[...], preferred_element_type=f32)

    g = jnp.dot(x, wx_ref[...], preferred_element_type=f32) + b_ref[...]
    r = jax.nn.sigmoid(g[:, 0:H])
    z = jax.nn.sigmoid(g[:, H:2 * H])
    n = jnp.tanh(g[:, 2 * H:3 * H] + r * g[:, 3 * H:4 * H])
    out_ref[...] = ((1.0 - z) * n).astype(out_ref.dtype)


def _vmem_spec():
    return pl.BlockSpec(memory_space=pltpu.MemorySpace.VMEM)


# ---------------------------------------------------------------------------
# Parameter init (mirrors nn.Embedding / nn.GRU shapes) + gate packing
# ---------------------------------------------------------------------------
def init_encoder_params(key, input_size, embed_size, hidden_size):
    k_emb, k_wih, k_whh, k_bih, k_bhh = jax.random.split(key, 5)
    V, E, H = input_size, embed_size, hidden_size
    bound = 1.0 / math.sqrt(H)

    embed = jax.random.normal(k_emb, (V, E), jnp.float32)
    # PyTorch GRU layout: weight_ih_l0 [3H, E], weight_hh_l0 [3H, H], biases [3H]
    # with gate order (r, z, n) along the stacked 3H axis.
    w_ih = jax.random.uniform(k_wih, (3 * H, E), jnp.float32, -bound, bound)
    w_hh = jax.random.uniform(k_whh, (3 * H, H), jnp.float32, -bound, bound)
    b_ih = jax.random.uniform(k_bih, (3 * H,), jnp.float32, -bound, bound)
    b_hh = jax.random.uniform(k_bhh, (3 * H,), jnp.float32, -bound, bound)

    def gate(w, g):
        return w[g * H:(g + 1) * H]

    # Lane-dense packed slabs (4 gate blocks of width H, padded to 128 lanes).
    n_pad = _round_up(4 * H, 128)
    w_x = jnp.zeros((E, n_pad), jnp.float32)
    w_h = jnp.zeros((H, n_pad), jnp.float32)
    b = jnp.zeros((1, n_pad), jnp.float32)

    w_x = (w_x.at[:, 0:H].set(gate(w_ih, 0).T)           # r  (input side)
               .at[:, H:2 * H].set(gate(w_ih, 1).T)      # z
               .at[:, 2 * H:3 * H].set(gate(w_ih, 2).T))  # i_n
    w_h = (w_h.at[:, 0:H].set(gate(w_hh, 0).T)           # r  (hidden side)
               .at[:, H:2 * H].set(gate(w_hh, 1).T)      # z
               .at[:, 3 * H:4 * H].set(gate(w_hh, 2).T))  # h_n
    b = (b.at[0, 0:H].set(b_ih[0:H] + b_hh[0:H])                   # b_r folded
          .at[0, H:2 * H].set(b_ih[H:2 * H] + b_hh[H:2 * H])       # b_z folded
          .at[0, 2 * H:3 * H].set(b_ih[2 * H:3 * H])               # b_in
          .at[0, 3 * H:4 * H].set(b_hh[2 * H:3 * H]))              # b_hn

    # TODO(synk): for v6e/v7x at real model sizes, store embed/w_x/w_h in
    # bfloat16 (f32 accumulation) and block the embedding table instead of
    # loading it whole; at these toy sizes f32 keeps exact reference parity.
    return {
        "hidden_size": H,
        "embed": embed,
        "w_x_packed": w_x,
        "w_h_packed": w_h,
        "b_packed": b,
        # raw tensors kept only for the pure-JAX reference check
        "w_ih": w_ih, "w_hh": w_hh, "b_ih": b_ih, "b_hh": b_hh,
    }


# ---------------------------------------------------------------------------
# Encoder forward: one fused pallas_call; wrapper does only padding/reshape.
# ---------------------------------------------------------------------------
def encoder_forward(params, x, hidden=None):
    H = params["hidden_size"]
    B = x.shape[0]
    B_pad = _round_up(max(B, 8), 8)   # sublane-aligned batch

    ids = jnp.zeros((B_pad, 1), jnp.int32).at[:B, 0].set(x.astype(jnp.int32))

    if hidden is None:
        ins = (ids, params["embed"], params["w_x_packed"], params["b_packed"])
        kernel = _encoder_fused_h0_kernel
    else:
        h0 = hidden.reshape(B, H).astype(jnp.float32)    # PyTorch hidden [1,B,H]
        h0p = jnp.zeros((B_pad, H), jnp.float32).at[:B].set(h0)
        ins = (ids, params["embed"], h0p, params["w_x_packed"],
               params["w_h_packed"], params["b_packed"])
        kernel = _encoder_fused_kernel

    h1_pad = pl.pallas_call(
        kernel,
        out_shape=jax.ShapeDtypeStruct((B_pad, H), jnp.float32),
        in_specs=[_vmem_spec() for _ in ins],
        out_specs=_vmem_spec(),
    )(*ins)

    h1 = h1_pad[:B]
    x_out = h1[:, None, :]     # [B, 1, H]  (batch_first)
    x_hidden = h1[None, :, :]  # [1, B, H]
    return x_out, x_hidden


# ---------------------------------------------------------------------------
# Pure-JAX reference (for correctness check)
# ---------------------------------------------------------------------------
def reference_forward(params, x, hidden=None):
    H = params["hidden_size"]
    B = x.shape[0]
    xe = jnp.take(params["embed"], x, axis=0)
    h = (jnp.zeros((B, H), jnp.float32) if hidden is None
         else hidden.reshape(B, H).astype(jnp.float32))
    gi = xe @ params["w_ih"].T + params["b_ih"]
    gh = h @ params["w_hh"].T + params["b_hh"]
    r = jax.nn.sigmoid(gi[:, 0:H] + gh[:, 0:H])
    z = jax.nn.sigmoid(gi[:, H:2 * H] + gh[:, H:2 * H])
    n = jnp.tanh(gi[:, 2 * H:3 * H] + r * gh[:, 2 * H:3 * H])
    h1 = (1.0 - z) * n + z * h
    return h1[:, None, :], h1[None, :, :]


if __name__ == "__main__":
    INPUT_SIZE = 16    # vocab
    EMBED_SIZE = 32
    HIDDEN_SIZE = 32
    B = 8              # batch of B length-1 sequences

    key = jax.random.PRNGKey(0)
    k_param, k_x, k_h = jax.random.split(key, 3)
    params = init_encoder_params(k_param, INPUT_SIZE, EMBED_SIZE, HIDDEN_SIZE)
    x = jax.random.randint(k_x, (B,), 0, INPUT_SIZE, dtype=jnp.int32)

    # Path 1: hidden=None (specialized h0 == 0 kernel, PyTorch default)
    x_out, x_hidden = encoder_forward(params, x)
    jax.block_until_ready((x_out, x_hidden))
    ref_out, ref_hidden = reference_forward(params, x)
    assert x_out.shape == (B, 1, HIDDEN_SIZE)
    assert x_hidden.shape == (1, B, HIDDEN_SIZE)
    assert jnp.allclose(x_out, ref_out, atol=1e-5, rtol=1e-5)
    assert jnp.allclose(x_hidden, ref_hidden, atol=1e-5, rtol=1e-5)

    # Path 2: explicit nonzero hidden (full kernel: recurrent matmul + z*h)
    hidden = jax.random.normal(k_h, (1, B, HIDDEN_SIZE), jnp.float32)
    x_out2, x_hidden2 = encoder_forward(params, x, hidden)
    jax.block_until_ready((x_out2, x_hidden2))
    ref_out2, ref_hidden2 = reference_forward(params, x, hidden)
    assert jnp.allclose(x_out2, ref_out2, atol=1e-5, rtol=1e-5)
    assert jnp.allclose(x_hidden2, ref_hidden2, atol=1e-5, rtol=1e-5)

    print("KERNEL_OK")
</pallas_src>

<mosaic_0001>
module attributes {stable_mosaic.version = 11 : i64} {
  func.func @_encoder_fused_h0_kernel(%arg0: memref<8x1xi32, #tpu.memory_space<vmem>>, %arg1: memref<16x32xf32, #tpu.memory_space<vmem>>, %arg2: memref<32x128xf32, #tpu.memory_space<vmem>>, %arg3: memref<1x128xf32, #tpu.memory_space<vmem>>, %arg4: memref<8x32xf32, #tpu.memory_space<vmem>>) attributes {dimension_semantics = [], scalar_prefetch = 0 : i64, scratch_operands = 0 : i64, tpu.core_type = #tpu.core_type<tc>} {
    %c0 = arith.constant 0 : index
    %c0_0 = arith.constant 0 : index
    %0 = vector.load %arg0[%c0, %c0_0] : memref<8x1xi32, #tpu.memory_space<vmem>>, vector<8x1xi32>
    %1 = tpu.iota {dimensions = array<i32: 1>} : vector<8x16xi32>
    %2 = vector.broadcast %0 : vector<8x1xi32> to vector<8x16xi32>
    %3 = arith.cmpi eq, %2, %1 : vector<8x16xi32>
    %4 = arith.extui %3 : vector<8x16xi1> to vector<8x16xi32>
    %5 = arith.sitofp %4 : vector<8x16xi32> to vector<8x16xf32>
    %c0_1 = arith.constant 0 : index
    %c0_2 = arith.constant 0 : index
    %6 = vector.load %arg1[%c0_1, %c0_2] : memref<16x32xf32, #tpu.memory_space<vmem>>, vector<16x32xf32>
    %cst = arith.constant dense<0.000000e+00> : vector<8x32xf32>
    %7 = tpu.matmul %5, %6, %cst {dimension_numbers = #tpu.dot_dimension_numbers<[1], [0], [0], [1], [0, 0, 1, 1], [], []>} : vector<8x16xf32>, vector<16x32xf32>, vector<8x32xf32> -> vector<8x32xf32>
    %c0_3 = arith.constant 0 : index
    %c0_4 = arith.constant 0 : index
    %8 = vector.load %arg2[%c0_3, %c0_4] : memref<32x128xf32, #tpu.memory_space<vmem>>, vector<32x128xf32>
    %cst_5 = arith.constant dense<0.000000e+00> : vector<8x128xf32>
    %9 = tpu.matmul %7, %8, %cst_5 {dimension_numbers = #tpu.dot_dimension_numbers<[1], [0], [0], [1], [0, 0, 1, 1], [], []>} : vector<8x32xf32>, vector<32x128xf32>, vector<8x128xf32> -> vector<8x128xf32>
    %c0_6 = arith.constant 0 : index
    %c0_7 = arith.constant 0 : index
    %10 = vector.load %arg3[%c0_6, %c0_7] : memref<1x128xf32, #tpu.memory_space<vmem>>, vector<1x128xf32>
    %11 = vector.broadcast %10 : vector<1x128xf32> to vector<8x128xf32>
    %12 = arith.addf %9, %11 : vector<8x128xf32>
    %13 = vector.extract_strided_slice %12 {offsets = [0, 0], sizes = [8, 32], strides = [1, 1]} : vector<8x128xf32> to vector<8x32xf32>
    %14 = arith.negf %13 : vector<8x32xf32>
    %15 = math.exp %14 : vector<8x32xf32>
    %cst_8 = arith.constant 1.000000e+00 : f32
    %16 = vector.broadcast %cst_8 : f32 to vector<8x32xf32>
    %17 = arith.addf %16, %15 : vector<8x32xf32>
    %18 = arith.divf %16, %17 : vector<8x32xf32>
    %19 = vector.extract_strided_slice %12 {offsets = [0, 32], sizes = [8, 32], strides = [1, 1]} : vector<8x128xf32> to vector<8x32xf32>
    %20 = arith.negf %19 : vector<8x32xf32>
    %21 = math.exp %20 : vector<8x32xf32>
    %cst_9 = arith.constant 1.000000e+00 : f32
    %22 = vector.broadcast %cst_9 : f32 to vector<8x32xf32>
    %23 = arith.addf %22, %21 : vector<8x32xf32>
    %24 = arith.divf %22, %23 : vector<8x32xf32>
    %25 = vector.extract_strided_slice %12 {offsets = [0, 64], sizes = [8, 32], strides = [1, 1]} : vector<8x128xf32> to vector<8x32xf32>
    %26 = vector.extract_strided_slice %12 {offsets = [0, 96], sizes = [8, 32], strides = [1, 1]} : vector<8x128xf32> to vector<8x32xf32>
    %27 = arith.mulf %18, %26 : vector<8x32xf32>
    %28 = arith.addf %25, %27 : vector<8x32xf32>
    %29 = math.tanh %28 : vector<8x32xf32>
    %cst_10 = arith.constant 1.000000e+00 : f32
    %30 = vector.broadcast %cst_10 : f32 to vector<8x32xf32>
    %31 = arith.subf %30, %24 : vector<8x32xf32>
    %32 = arith.mulf %31, %29 : vector<8x32xf32>
    %c0_11 = arith.constant 0 : index
    %c0_12 = arith.constant 0 : index
    %33 = vector.load %arg4[%c0_11, %c0_12] : memref<8x32xf32, #tpu.memory_space<vmem>>, vector<8x32xf32>
    tpu.vector_store %arg4[%c0_11, %c0_12], %32 {strides = array<i32>} : memref<8x32xf32, #tpu.memory_space<vmem>>, vector<8x32xf32>,
    return
  }
}

</mosaic_0001>

<llo_original>
// kernel: tpu_custom_call.1
$region0: #{tpu_custom_call.1}
  #allocation0 [shape = 'u32[]', space=smem, size = 0x4, offset = 0x4, fixed_abs, tag = 'smem constant byte address 0x4 - core index']
  #allocation1 [shape = 'u32[144,128]{1,0:T(1,128)}', space=vmem, size = 0x12000, scoped, tag = 'internal scratch']
  %s0 = inlined_call_operand.vmem [shape: s32[8,1], index: 0, kind: input, shape index: {}]
  %s1 = inlined_call_operand.hbm [shape: f32[16,32], index: 1, kind: input, shape index: {}]
  %s2 = inlined_call_operand.hbm [shape: f32[32,128], index: 2, kind: input, shape index: {}]
  %s3 = inlined_call_operand.vmem [shape: f32[1,128], index: 3, kind: input, shape index: {}]
  %s4 = inlined_call_operand.hbm [shape: f32[8,32], index: 4, kind: output, shape index: {}]
  %s5 = sld [smem:[#allocation0]]
  $region34: #{tpu_custom_call.1} parent=0
    _
  %s7 = ssub.s32 1, %s5
  %s8 = scalar_select 0, %s7, %s5
  $region1: #{tpu_custom_call.1} parent=0
    #allocation2 [shape = 'u8[8192]{0}', space=vmem, size = 0x2000, scoped, tag = 'input window, operand 1, single buffered']
    #allocation3 [shape = 's32[1]{0}', space=sflag, size = 0x4, scoped, tag = 'scoped memory for tpu_custom_call.1']
    #allocation4 [shape = 's32[1]{0}', space=sflag, size = 0x4, scoped, tag = 'scoped memory for tpu_custom_call.1']
    #allocation5 [shape = 'u8[16384]{0}', space=vmem, size = 0x4000, scoped, tag = 'input window, operand 2, single buffered']
    #allocation6 [shape = 's32[1]{0}', space=sflag, size = 0x4, scoped, tag = 'scoped memory for tpu_custom_call.1']
    #allocation7 [shape = 'u8[4096]{0}', space=vmem, size = 0x1000, scoped, tag = 'output window, operand 0, single buffered']
    %9 = vsyncpa [#allocation3], 0
    %10 = vsyncpa [#allocation6], 0
    %11 = vsyncpa [#allocation4], 0
    // Predicated region
    $region2: #{tpu_custom_call.1} parent=1 // pred_check
      _
    $region3: #{tpu_custom_call.1} parent=1 // pred_check_branch
      %13 = sbr.rel (0) target = $region5
    $region4: #{tpu_custom_call.1} parent=1 // pred_region
      _
    $region5: #{tpu_custom_call.1} parent=1 // pred_fallthru
      _
    // Predicated region
    $region6: #{tpu_custom_call.1} parent=1 // pred_check
      _
    $region7: #{tpu_custom_call.1} parent=1 // pred_check_branch
      %15 = sbr.rel (0) target = $region9
    $region8: #{tpu_custom_call.1} parent=1 // pred_region
      %s17 = ssub.s32 256, 256
      %18 = vsyncadd [#allocation3], %s17
      %s19 = sshll.u32 [#allocation2], 4
      %s20 = int_to_ptr.vmem [resolvable:$true] %s19
      %25 = dma.hbm_to_vmem [thread:$0]  %s1, 256, %s20, [#allocation3], 128, 128, 8
    $region9: #{tpu_custom_call.1} parent=1 // pred_fallthru
      _
    // Predicated region
    $region10: #{tpu_custom_call.1} parent=1 // pred_check
      _
    $region11: #{tpu_custom_call.1} parent=1 // pred_check_branch
      %27 = sbr.rel (0) target = $region13
    $region12: #{tpu_custom_call.1} parent=1 // pred_region
      %s29 = ssub.s32 512, 512
      %30 = vsyncadd [#allocation6], %s29
      %s31 = sshll.u32 [#allocation5], 4
      %s32 = int_to_ptr.vmem [resolvable:$true] %s31
      %37 = dma.hbm_to_vmem [thread:$0]  %s2, 512, %s32, [#allocation6], 128, 128, 8
    $region13: #{tpu_custom_call.1} parent=1 // pred_fallthru
      _
    // Predicated region
    $region14: #{tpu_custom_call.1} parent=1 // pred_check
      _
    $region15: #{tpu_custom_call.1} parent=1 // pred_check_branch
      %39 = sbr.rel (0) target = $region17
    $region16: #{tpu_custom_call.1} parent=1 // pred_region
      _
    $region17: #{tpu_custom_call.1} parent=1 // pred_fallthru
      _
    // Predicated region
    $region18: #{tpu_custom_call.1} parent=1 // pred_check
      _
    $region19: #{tpu_custom_call.1} parent=1 // pred_check_branch
      %41 = sbr.rel (0) target = $region21
    $region20: #{tpu_custom_call.1} parent=1 // pred_region
      %42 = dma.done [#allocation3], 256
    $region21: #{tpu_custom_call.1} parent=1 // pred_fallthru
      _
    // Predicated region
    $region22: #{tpu_custom_call.1} parent=1 // pred_check
      _
    $region23: #{tpu_custom_call.1} parent=1 // pred_check_branch
      %44 = sbr.rel (0) target = $region25
    $region24: #{tpu_custom_call.1} parent=1 // pred_region
      %45 = dma.done [#allocation6], 512
    $region25: #{tpu_custom_call.1} parent=1 // pred_fallthru
      _
    %v46 = vld [vmem:[%s0] sm:$0xff]
    %v47 = vlaneseq
    %v48 = vand.u32 %v47, 127
    %49 = vset.pattern.permute.xlu0 0
    %50 = vperm.xlu0 %49, %v46
    %v51 = vpop.permute.xlu0 %50
    %vm52 = vcmp.eq.s32.totalorder %v51, %v48
    %v53 = vsel %vm52, 1, 0
    %v54 = vcvt.s32.f32 %v53
    %v55 = vld [vmem:[#allocation2] sm:$0xff]
    %v56 = vld [vmem:[#allocation2 + $0x8] sm:$0xff]
    %vm57 = vcmask 130048
    %v59 = vsel %vm57, %v54, 0
    %61 = vmatprep.subr.mxu0 0.0
    %62 = vmatpush1.msra.mxu0 %v55
    %63 = vmatprep.subr.mxu0 0.0
    %64 = vmatpush1.msra.mxu0 %v56
    %65 = vmatprep.subr.mxu0 0.0
    %66 = vmatpush1.msra.mxu0 0.0
    %67 = vmatprep.subr.mxu0 0.0
    %68 = vmatpush1.msra.mxu0 0.0
    %69 = vmatprep.subr.mxu0 0.0
    %70 = vmatpush1.msra.mxu0 0.0
    %71 = vmatprep.subr.mxu0 0.0
    %72 = vmatpush1.msra.mxu0 0.0
    %73 = vmatprep.subr.mxu0 0.0
    %74 = vmatpush1.msra.mxu0 0.0
    %75 = vmatprep.subr.mxu0 0.0
    %76 = vmatpush1.msra.mxu0 0.0
    %77 = vmatprep.subr.mxu0 0.0
    %78 = vmatpush1.msra.mxu0 0.0
    %79 = vmatprep.subr.mxu0 0.0
    %80 = vmatpush1.msra.mxu0 0.0
    %81 = vmatprep.subr.mxu0 0.0
    %82 = vmatpush1.msra.mxu0 0.0
    %83 = vmatprep.subr.mxu0 0.0
    %84 = vmatpush1.msra.mxu0 0.0
    %85 = vmatprep.subr.mxu0 0.0
    %86 = vmatpush1.msra.mxu0 0.0
    %87 = vmatprep.subr.mxu0 0.0
    %88 = vmatpush1.msra.mxu0 0.0
    %89 = vmatprep.subr.mxu0 0.0
    %90 = vmatpush1.msra.mxu0 0.0
    %91 = vmatprep.subr.mxu0 0.0
    %92 = vmatpush1.msra.mxu0 0.0
    %93 = vmatprep.subr.mxu0 0.0
    %94 = vmatpush1.msra.mxu0 0.0
    %95 = vmatprep.subr.mxu0 0.0
    %96 = vmatpush1.msra.mxu0 0.0
    %97 = vmatprep.subr.mxu0 0.0
    %98 = vmatpush1.msra.mxu0 0.0
    %99 = vmatprep.subr.mxu0 0.0
    %100 = vmatpush1.msra.mxu0 0.0
    %101 = vmatprep.subr.mxu0 0.0
    %102 = vmatpush1.msra.mxu0 0.0
    %103 = vmatprep.subr.mxu0 0.0
    %104 = vmatpush1.msra.mxu0 0.0
    %105 = vmatprep.subr.mxu0 0.0
    %106 = vmatpush1.msra.mxu0 0.0
    %107 = vmatprep.subr.mxu0 0.0
    %108 = vmatpush1.msra.mxu0 0.0
    %109 = vmatprep.subr.mxu0 0.0
    %110 = vmatpush1.msra.mxu0 0.0
    %111 = vmatprep.subr.mxu0 0.0
    %112 = vmatpush1.msra.mxu0 0.0
    %113 = vmatprep.subr.mxu0 0.0
    %114 = vmatpush1.msra.mxu0 0.0
    %115 = vmatprep.subr.mxu0 0.0
    %116 = vmatpush1.msra.mxu0 0.0
    %117 = vmatprep.subr.mxu0 0.0
    %118 = vmatpush1.msra.mxu0 0.0
    %119 = vmatprep.subr.mxu0 0.0
    %120 = vmatpush1.msra.mxu0 0.0
    %121 = vmatprep.subr.mxu0 0.0
    %122 = vmatpush1.msra.mxu0 0.0
    %123 = vmatprep.subr.mxu0 0.0
    %124 = vmatpush1.msra.mxu0 0.0
    %125 = vmatprep.mubr.f32.mxu0 0.0
    %126 = vmatmul.mubr.f32.gmra.mrb[0].mxu0 %v59
    %v127 = vpop.f32.mrb[0].mxu0
    %v128 = vadd.f32 0.0, %v127
    %v129 = vpop.f32.mrb[0].mxu0
    %130 = vdwg.mxu0
    %v131 = vld [vmem:[#allocation5] sm:$0xff]
    %v132 = vld [vmem:[#allocation5 + $0x8] sm:$0xff]
    %v133 = vld [vmem:[#allocation5 + $0x10] sm:$0xff]
    %v134 = vld [vmem:[#allocation5 + $0x18] sm:$0xff]
    %v135 = vld [vmem:[%s3] sm:$0x1]
    %v137 = vlaneseq
    %v138 = vshrl.u32 %v137, 7
    %v139 = vsub.s32 0, %v138
    %v140 = vrot.slane %v135, %v139
    %vm142 = vcmask 261120
    %v144 = vsel %vm142, %v128, 0
    %146 = vmatprep.subr.mxu0 0.0
    %147 = vmatpush1.msra.mxu0 %v131
    %148 = vmatprep.subr.mxu0 0.0
    %149 = vmatpush1.msra.mxu0 %v132
    %150 = vmatprep.subr.mxu0 0.0
    %151 = vmatpush1.msra.mxu0 %v133
    %152 = vmatprep.subr.mxu0 0.0
    %153 = vmatpush1.msra.mxu0 %v134
    %154 = vmatprep.subr.mxu0 0.0
    %155 = vmatpush1.msra.mxu0 0.0
    %156 = vmatprep.subr.mxu0 0.0
    %157 = vmatpush1.msra.mxu0 0.0
    %158 = vmatprep.subr.mxu0 0.0
    %159 = vmatpush1.msra.mxu0 0.0
    %160 = vmatprep.subr.mxu0 0.0
    %161 = vmatpush1.msra.mxu0 0.0
    %162 = vmatprep.subr.mxu0 0.0
    %163 = vmatpush1.msra.mxu0 0.0
    %164 = vmatprep.subr.mxu0 0.0
    %165 = vmatpush1.msra.mxu0 0.0
    %166 = vmatprep.subr.mxu0 0.0
    %167 = vmatpush1.msra.mxu0 0.0
    %168 = vmatprep.subr.mxu0 0.0
    %169 = vmatpush1.msra.mxu0 0.0
    %170 = vmatprep.subr.mxu0 0.0
    %171 = vmatpush1.msra.mxu0 0.0
    %172 = vmatprep.subr.mxu0 0.0
    %173 = vmatpush1.msra.mxu0 0.0
    %174 = vmatprep.subr.mxu0 0.0
    %175 = vmatpush1.msra.mxu0 0.0
    %176 = vmatprep.subr.mxu0 0.0
    %177 = vmatpush1.msra.mxu0 0.0
    %178 = vmatprep.subr.mxu0 0.0
    %179 = vmatpush1.msra.mxu0 0.0
    %180 = vmatprep.subr.mxu0 0.0
    %181 = vmatpush1.msra.mxu0 0.0
    %182 = vmatprep.subr.mxu0 0.0
    %183 = vmatpush1.msra.mxu0 0.0
    %184 = vmatprep.subr.mxu0 0.0
    %185 = vmatpush1.msra.mxu0 0.0
    %186 = vmatprep.subr.mxu0 0.0
    %187 = vmatpush1.msra.mxu0 0.0
    %188 = vmatprep.subr.mxu0 0.0
    %189 = vmatpush1.msra.mxu0 0.0
    %190 = vmatprep.subr.mxu0 0.0
    %191 = vmatpush1.msra.mxu0 0.0
    %192 = vmatprep.subr.mxu0 0.0
    %193 = vmatpush1.msra.mxu0 0.0
    %194 = vmatprep.subr.mxu0 0.0
    %195 = vmatpush1.msra.mxu0 0.0
    %196 = vmatprep.subr.mxu0 0.0
    %197 = vmatpush1.msra.mxu0 0.0
    %198 = vmatprep.subr.mxu0 0.0
    %199 = vmatpush1.msra.mxu0 0.0
    %200 = vmatprep.subr.mxu0 0.0
    %201 = vmatpush1.msra.mxu0 0.0
    %202 = vmatprep.subr.mxu0 0.0
    %203 = vmatpush1.msra.mxu0 0.0
    %204 = vmatprep.subr.mxu0 0.0
    %205 = vmatpush1.msra.mxu0 0.0
    %206 = vmatprep.subr.mxu0 0.0
    %207 = vmatpush1.msra.mxu0 0.0
    %208 = vmatprep.subr.mxu0 0.0
    %209 = vmatpush1.msra.mxu0 0.0
    %210 = vmatprep.mubr.f32.mxu0 0.0
    %211 = vmatmul.mubr.f32.gmra.mrb[0].mxu0 %v144
    %v212 = vpop.f32.mrb[0].mxu0
    %v213 = vadd.f32 %v140, %v212
    %v214 = vpop.f32.mrb[0].mxu0
    %215 = vdwg.mxu0
    %v216 = vxor.u32 %v213, 2147483648
    %v217 = vmul.f32 %v216, 1.442695
    %v218 = vpow.pop %v217
    %v219 = vadd.f32 %v218, 1.0
    %v220 = vrcp.pop %v219
    %v221 = vmul.f32 1.0, %v220
    %223 = vrot.lane.b32.xlu0 %v213, 32
    %v224 = vpop.permute.xlu0 %223
    %v226 = vmul.f32 %v221, %v224
    %228 = vrot.lane.b32.xlu0 %v226, 64
    %v229 = vpop.permute.xlu0 %228
    %v231 = vadd.f32 %v213, %v229
    %v232 = vtanh.pop %v231
    %v233 = vsub.f32 1.0, %v221
    %235 = vrot.lane.b32.xlu0 %v232, 96
    %v236 = vpop.permute.xlu0 %235
    %v238 = vmul.f32 %v233, %v236
    %240 = vrot.lane.b32.xlu0 %v238, 96
    %v241 = vpop.permute.xlu0 %240
    %243 = vst.msk [vmem:[#allocation7] sm:$0xff] %vm142, %v241
    // Predicated region
    $region26: #{tpu_custom_call.1} parent=1 // pred_check
      _
    $region27: #{tpu_custom_call.1} parent=1 // pred_check_branch
      %245 = sbr.rel (0) target = $region29
    $region28: #{tpu_custom_call.1} parent=1 // pred_region
      %s247 = ssub.s32 128, 128
      %248 = vsyncadd [#allocation4], %s247
      %s250 = sshll.u32 [#allocation7], 4
      %s251 = int_to_ptr.vmem [resolvable:$true] %s250
      %253 = dma.vmem_to_hbm [thread:$0]  %s251, 128, %s4, [#allocation4]
    $region29: #{tpu_custom_call.1} parent=1 // pred_fallthru
      _
    // Predicated region
    $region30: #{tpu_custom_call.1} parent=1 // pred_check
      _
    $region31: #{tpu_custom_call.1} parent=1 // pred_check_branch
      %255 = sbr.rel (0) target = $region33
    $region32: #{tpu_custom_call.1} parent=1 // pred_region
      %256 = dma.done [#allocation4], 128
    $region33: #{tpu_custom_call.1} parent=1 // pred_fallthru
      _
    %257 = vsyncpa [#allocation3], 1
    %258 = vsyncpa [#allocation6], 1
    %259 = vsyncpa [#allocation4], 1

</llo_original>
